<compile_context>
chip_gen: v7x
topology: tpu7x:2x2x1
jax: 0.10.0
libtpu: 0.0.40
codegen_flags: <defaults>
</compile_context>

<pallas_src>
import math

import jax
import jax.numpy as jnp
from jax import lax
from jax.experimental import pallas as pl
from jax.experimental.pallas import tpu as pltpu


def _round_up(x: int, m: int) -> int:
    return ((x + m - 1) // m) * m


def _biaffine_kernel(d_ref, w_ref, h_ref, o_ref, t_ref):
    """One grid step = (batch b, o-chunk oc, x-tile xi, y-tile yi).

    d_ref: (1, tx, Wp)       dependents for this x-tile (padded contraction dim)
    w_ref: (Wp, to*Wp)       W_flat[i, o_local*Wp + j] = W[oc*to + o_local, i, j]
    h_ref: (1, ty, Wp)       heads for this y-tile
    o_ref: (1, to, tx, ty)   scores, HBM layout (B, O, X, Y)
    t_ref: (tx, to*Wp)       scratch: T[x, o_local*Wp + j] = sum_i d[x,i] W[o,i,j]
    """
    yi = pl.program_id(3)

    # First-stage matmul is hoisted: compute it only once per (b, oc, xi)
    # and reuse it for every y-tile.
    @pl.when(yi == 0)
    def _():
        t = jnp.dot(d_ref[0], w_ref[...], preferred_element_type=jnp.float32)
        t_ref[...] = t.astype(t_ref.dtype)

    h = h_ref[0]                       # (ty, Wp)
    to = o_ref.shape[1]
    wp = h.shape[1]
    for o in range(to):                # static unroll over the (small) o-chunk
        t_o = t_ref[:, o * wp:(o + 1) * wp]              # (tx, Wp), 128-aligned slice
        # S_o[x, y] = sum_j T_o[x, j] * h[y, j]  — contract last dims, no .T
        s = lax.dot_general(
            t_o, h,
            dimension_numbers=(((1,), (1,)), ((), ())),
            preferred_element_type=jnp.float32,
        )                                                # (tx, ty)
        o_ref[0, o] = s.astype(o_ref.dtype)


def biaffine_forward(d, h, weight, bias: bool, *, compute_dtype=None,
                     tx=None, ty=None, to=None, channels_last=True):
    """Pallas implementation of BiAffine.forward.

    d: (B, X, Din), h: (B, Y, Din), weight: (O, W, W) with W = Din + bias.
    Returns (B, X, Y, O) float32 (or (B, O, X, Y) if channels_last=False).
    """
    B, X, Din = d.shape
    Bh, Y, Dh = h.shape
    assert Bh == B and Dh == Din
    O, Win, Win2 = weight.shape
    assert Win == Win2 == Din + (1 if bias else 0)

    cdt = jnp.dtype(compute_dtype) if compute_dtype is not None else jnp.dtype(d.dtype)
    itemsize = cdt.itemsize
    Wp = _round_up(Win, 128)

    # ---- one-shot operand prep (plain JAX, outside the kernel) -------------
    def _pad_act(x):
        parts = [x.astype(cdt)]
        if bias:
            parts.append(jnp.ones((*x.shape[:-1], 1), cdt))
        if Wp > Win:
            parts.append(jnp.zeros((*x.shape[:-1], Wp - Win), cdt))
        return parts[0] if len(parts) == 1 else jnp.concatenate(parts, axis=-1)

    d_p = _pad_act(d)                                      # (B, X, Wp)
    h_p = _pad_act(h)                                      # (B, Y, Wp)

    # W_flat[i, o*Wp + j] = W[o, i, j], zero-padded to (Wp, O*Wp).
    w_pad = jnp.zeros((O, Wp, Wp), cdt).at[:, :Win, :Win].set(weight.astype(cdt))
    w_flat = jnp.transpose(w_pad, (1, 0, 2)).reshape(Wp, O * Wp)

    # ---- tile selection ------------------------------------------------------
    if tx is None:
        tx = X if X <= 256 else 256
    if ty is None:
        ty = Y if Y <= 256 else 256     # multiple of 128 whenever Y is tiled
    if to is None:
        # Largest divisor of O whose (Wp, to*Wp) weight slab stays under ~8 MiB.
        max_to = max(1, (8 * 1024 * 1024) // (Wp * Wp * itemsize))
        to = 1
        for cand in range(1, O + 1):
            if O % cand == 0 and cand <= max_to:
                to = cand
    assert O % to == 0

    grid = (B, O // to, pl.cdiv(X, tx), pl.cdiv(Y, ty))

    flops = 2 * B * O * X * Wp * (Wp + Y)
    bytes_accessed = (d_p.size + h_p.size + w_flat.size) * itemsize + B * O * X * Y * 4
    cost = pl.CostEstimate(flops=flops, transcendentals=0,
                           bytes_accessed=bytes_accessed)

    out_boxy = pl.pallas_call(
        _biaffine_kernel,
        out_shape=jax.ShapeDtypeStruct((B, O, X, Y), jnp.float32),
        grid_spec=pltpu.PrefetchScalarGridSpec(
            num_scalar_prefetch=0,
            grid=grid,
            in_specs=[
                pl.BlockSpec((1, tx, Wp), lambda b, oc, xi, yi: (b, xi, 0)),
                pl.BlockSpec((Wp, to * Wp), lambda b, oc, xi, yi: (0, oc)),
                pl.BlockSpec((1, ty, Wp), lambda b, oc, xi, yi: (b, yi, 0)),
            ],
            out_specs=pl.BlockSpec((1, to, tx, ty),
                                   lambda b, oc, xi, yi: (b, oc, xi, yi)),
            scratch_shapes=[pltpu.VMEM((tx, to * Wp), cdt)],
        ),
        compiler_params=pltpu.CompilerParams(
            dimension_semantics=("parallel", "parallel", "parallel", "arbitrary"),
            vmem_limit_bytes=48 * 1024 * 1024,
        ),
        cost_estimate=cost,
    )(d_p, w_flat, h_p)

    if not channels_last:
        return out_boxy                 # (B, O, X, Y): no extra HBM pass
    # Module semantics require (B, X, Y, O); this permutation is the only
    # remaining extra HBM pass over the output.
    return jnp.transpose(out_boxy, (0, 2, 3, 1))


def init_biaffine_weight(key, input_dim: int, output_dim: int, bias: bool):
    """Deterministic xavier_uniform_ equivalent for weight (O, W, W)."""
    w_in = input_dim + 1 if bias else input_dim
    receptive = w_in
    fan_in = w_in * receptive
    fan_out = output_dim * receptive
    bound = math.sqrt(6.0 / (fan_in + fan_out))
    return jax.random.uniform(
        key, (output_dim, w_in, w_in), jnp.float32, minval=-bound, maxval=bound
    )


if __name__ == "__main__":
    # Small, module-consistent shapes.
    B = 2            # batch_size
    X = 8            # num_dependents
    Y = 8            # num_heads
    INPUT_DIM = 32
    OUTPUT_DIM = 4
    BIAS = True

    key = jax.random.PRNGKey(0)
    kd, kh, kw = jax.random.split(key, 3)
    d = jax.random.normal(kd, (B, X, INPUT_DIM), jnp.float32)
    h = jax.random.normal(kh, (B, Y, INPUT_DIM), jnp.float32)
    weight = init_biaffine_weight(kw, INPUT_DIM, OUTPUT_DIM, BIAS)

    # f32 run (matches module semantics exactly).
    out = jax.block_until_ready(biaffine_forward(d, h, weight, BIAS))

    # Reference: plain-JAX einsum with the same semantics as the torch module.
    d_b = jnp.concatenate([d, jnp.ones((B, X, 1), d.dtype)], axis=-1)
    h_b = jnp.concatenate([h, jnp.ones((B, Y, 1), h.dtype)], axis=-1)
    ref = jnp.einsum("bxi,oij,byj->bxyo", d_b, weight, h_b)
    assert out.shape == (B, X, Y, OUTPUT_DIM)
    assert jnp.allclose(out, ref, atol=1e-3, rtol=1e-3)

    # bf16 compute path (v6e/v7x MXU lever), f32 accumulation -> looser check.
    out_bf16 = jax.block_until_ready(
        biaffine_forward(d, h, weight, BIAS, compute_dtype=jnp.bfloat16))
    assert out_bf16.shape == (B, X, Y, OUTPUT_DIM)
    assert jnp.allclose(out_bf16, ref, atol=0.3, rtol=0.1)

    print("KERNEL_OK")
</pallas_src>

<mosaic_0001>
module attributes {stable_mosaic.version = 11 : i64} {
  func.func @_biaffine_kernel(%arg0: i32, %arg1: i32, %arg2: i32, %arg3: i32, %arg4: memref<1x8x128xf32, #tpu.memory_space<vmem>>, %arg5: memref<128x512xf32, #tpu.memory_space<vmem>>, %arg6: memref<1x8x128xf32, #tpu.memory_space<vmem>>, %arg7: memref<1x4x8x8xf32, #tpu.memory_space<vmem>>, %arg8: memref<8x512xf32, #tpu.memory_space<vmem>>) attributes {dimension_semantics = [#tpu.dimension_semantics<parallel>, #tpu.dimension_semantics<parallel>, #tpu.dimension_semantics<parallel>, #tpu.dimension_semantics<arbitrary>], iteration_bounds = array<i64: 2, 1, 1, 1>, scalar_prefetch = 0 : i64, scratch_operands = 1 : i64, tpu.core_type = #tpu.core_type<tc>, window_params = [{transform_indices = @transform_0, window_bounds = array<i64: 1, 8, 128>}, {transform_indices = @transform_1, window_bounds = array<i64: 128, 512>}, {transform_indices = @transform_2, window_bounds = array<i64: 1, 8, 128>}, {transform_indices = @transform_3, window_bounds = array<i64: 1, 4, 8, 8>}]} {
    %c0_i32 = arith.constant 0 : i32
    %0 = arith.cmpi eq, %arg3, %c0_i32 : i32
    %1 = arith.extui %0 : i1 to i32
    %c0_i32_0 = arith.constant 0 : i32
    %2 = arith.cmpi ne, %1, %c0_i32_0 : i32
    scf.if %2 {
      %c0_24 = arith.constant 0 : index
      %c0_25 = arith.constant 0 : index
      %c0_26 = arith.constant 0 : index
      %25 = vector.load %arg4[%c0_24, %c0_25, %c0_26] : memref<1x8x128xf32, #tpu.memory_space<vmem>>, vector<1x8x128xf32>
      %26 = vector.shape_cast %25 : vector<1x8x128xf32> to vector<8x128xf32>
      %c0_27 = arith.constant 0 : index
      %c0_28 = arith.constant 0 : index
      %27 = vector.load %arg5[%c0_27, %c0_28] : memref<128x512xf32, #tpu.memory_space<vmem>>, vector<128x512xf32>
      %cst_29 = arith.constant dense<0.000000e+00> : vector<8x512xf32>
      %28 = tpu.matmul %26, %27, %cst_29 {dimension_numbers = #tpu.dot_dimension_numbers<[1], [0], [0], [1], [0, 0, 1, 1], [], []>} : vector<8x128xf32>, vector<128x512xf32>, vector<8x512xf32> -> vector<8x512xf32>
      %c0_30 = arith.constant 0 : index
      %c0_31 = arith.constant 0 : index
      %29 = vector.load %arg8[%c0_30, %c0_31] : memref<8x512xf32, #tpu.memory_space<vmem>>, vector<8x512xf32>
      tpu.vector_store %arg8[%c0_30, %c0_31], %28 {strides = array<i32>} : memref<8x512xf32, #tpu.memory_space<vmem>>, vector<8x512xf32>,
    } else {
    }
    %c0 = arith.constant 0 : index
    %c0_1 = arith.constant 0 : index
    %c0_2 = arith.constant 0 : index
    %3 = vector.load %arg6[%c0, %c0_1, %c0_2] : memref<1x8x128xf32, #tpu.memory_space<vmem>>, vector<1x8x128xf32>
    %4 = vector.shape_cast %3 : vector<1x8x128xf32> to vector<8x128xf32>
    %c0_3 = arith.constant 0 : index
    %c0_4 = arith.constant 0 : index
    %5 = vector.load %arg8[%c0_3, %c0_4] : memref<8x512xf32, #tpu.memory_space<vmem>>, vector<8x128xf32>
    %cst = arith.constant dense<0.000000e+00> : vector<8x8xf32>
    %6 = tpu.matmul %5, %4, %cst {dimension_numbers = #tpu.dot_dimension_numbers<[1], [1], [0], [0], [0, 0, 1, 0], [], []>} : vector<8x128xf32>, vector<8x128xf32>, vector<8x8xf32> -> vector<8x8xf32>
    %c0_5 = arith.constant 0 : index
    %c0_6 = arith.constant 0 : index
    %c0_7 = arith.constant 0 : index
    %c0_8 = arith.constant 0 : index
    %7 = vector.load %arg7[%c0_5, %c0_6, %c0_7, %c0_8] : memref<1x4x8x8xf32, #tpu.memory_space<vmem>>, vector<1x1x8x8xf32>
    %8 = vector.shape_cast %7 : vector<1x1x8x8xf32> to vector<8x8xf32>
    %9 = vector.shape_cast %6 : vector<8x8xf32> to vector<1x1x8x8xf32>
    tpu.vector_store %arg7[%c0_5, %c0_6, %c0_7, %c0_8], %9 {strides = array<i32>} : memref<1x4x8x8xf32, #tpu.memory_space<vmem>>, vector<1x1x8x8xf32>,
    %c0_9 = arith.constant 0 : index
    %c128 = arith.constant 128 : index
    %10 = vector.load %arg8[%c0_9, %c128] : memref<8x512xf32, #tpu.memory_space<vmem>>, vector<8x128xf32>
    %cst_10 = arith.constant dense<0.000000e+00> : vector<8x8xf32>
    %11 = tpu.matmul %10, %4, %cst_10 {dimension_numbers = #tpu.dot_dimension_numbers<[1], [1], [0], [0], [0, 0, 1, 0], [], []>} : vector<8x128xf32>, vector<8x128xf32>, vector<8x8xf32> -> vector<8x8xf32>
    %c0_11 = arith.constant 0 : index
    %c1 = arith.constant 1 : index
    %c0_12 = arith.constant 0 : index
    %c0_13 = arith.constant 0 : index
    %12 = vector.load %arg7[%c0_11, %c1, %c0_12, %c0_13] : memref<1x4x8x8xf32, #tpu.memory_space<vmem>>, vector<1x1x8x8xf32>
    %13 = vector.shape_cast %12 : vector<1x1x8x8xf32> to vector<8x8xf32>
    %14 = vector.shape_cast %11 : vector<8x8xf32> to vector<1x1x8x8xf32>
    tpu.vector_store %arg7[%c0_11, %c1, %c0_12, %c0_13], %14 {strides = array<i32>} : memref<1x4x8x8xf32, #tpu.memory_space<vmem>>, vector<1x1x8x8xf32>,
    %c0_14 = arith.constant 0 : index
    %c256 = arith.constant 256 : index
    %15 = vector.load %arg8[%c0_14, %c256] : memref<8x512xf32, #tpu.memory_space<vmem>>, vector<8x128xf32>
    %cst_15 = arith.constant dense<0.000000e+00> : vector<8x8xf32>
    %16 = tpu.matmul %15, %4, %cst_15 {dimension_numbers = #tpu.dot_dimension_numbers<[1], [1], [0], [0], [0, 0, 1, 0], [], []>} : vector<8x128xf32>, vector<8x128xf32>, vector<8x8xf32> -> vector<8x8xf32>
    %c0_16 = arith.constant 0 : index
    %c2 = arith.constant 2 : index
    %c0_17 = arith.constant 0 : index
    %c0_18 = arith.constant 0 : index
    %17 = vector.load %arg7[%c0_16, %c2, %c0_17, %c0_18] : memref<1x4x8x8xf32, #tpu.memory_space<vmem>>, vector<1x1x8x8xf32>
    %18 = vector.shape_cast %17 : vector<1x1x8x8xf32> to vector<8x8xf32>
    %19 = vector.shape_cast %16 : vector<8x8xf32> to vector<1x1x8x8xf32>
    tpu.vector_store %arg7[%c0_16, %c2, %c0_17, %c0_18], %19 {strides = array<i32>} : memref<1x4x8x8xf32, #tpu.memory_space<vmem>>, vector<1x1x8x8xf32>,
    %c0_19 = arith.constant 0 : index
    %c384 = arith.constant 384 : index
    %20 = vector.load %arg8[%c0_19, %c384] : memref<8x512xf32, #tpu.memory_space<vmem>>, vector<8x128xf32>
    %cst_20 = arith.constant dense<0.000000e+00> : vector<8x8xf32>
    %21 = tpu.matmul %20, %4, %cst_20 {dimension_numbers = #tpu.dot_dimension_numbers<[1], [1], [0], [0], [0, 0, 1, 0], [], []>} : vector<8x128xf32>, vector<8x128xf32>, vector<8x8xf32> -> vector<8x8xf32>
    %c0_21 = arith.constant 0 : index
    %c3 = arith.constant 3 : index
    %c0_22 = arith.constant 0 : index
    %c0_23 = arith.constant 0 : index
    %22 = vector.load %arg7[%c0_21, %c3, %c0_22, %c0_23] : memref<1x4x8x8xf32, #tpu.memory_space<vmem>>, vector<1x1x8x8xf32>
    %23 = vector.shape_cast %22 : vector<1x1x8x8xf32> to vector<8x8xf32>
    %24 = vector.shape_cast %21 : vector<8x8xf32> to vector<1x1x8x8xf32>
    tpu.vector_store %arg7[%c0_21, %c3, %c0_22, %c0_23], %24 {strides = array<i32>} : memref<1x4x8x8xf32, #tpu.memory_space<vmem>>, vector<1x1x8x8xf32>,
    return
  }
  func.func @transform_0(%arg0: i32, %arg1: i32, %arg2: i32, %arg3: i32) -> (i32, i32, i32) {
    %c0_i32 = arith.constant 0 : i32
    %c0_i32_0 = arith.constant 0 : i32
    return %arg0, %arg2, %c0_i32 : i32, i32, i32
  }
  func.func @transform_1(%arg0: i32, %arg1: i32, %arg2: i32, %arg3: i32) -> (i32, i32) {
    %c0_i32 = arith.constant 0 : i32
    %c0_i32_0 = arith.constant 0 : i32
    return %c0_i32, %arg1 : i32, i32
  }
  func.func @transform_2(%arg0: i32, %arg1: i32, %arg2: i32, %arg3: i32) -> (i32, i32, i32) {
    %c0_i32 = arith.constant 0 : i32
    %c0_i32_0 = arith.constant 0 : i32
    return %arg0, %arg3, %c0_i32 : i32, i32, i32
  }
  func.func @transform_3(%arg0: i32, %arg1: i32, %arg2: i32, %arg3: i32) -> (i32, i32, i32, i32) {
    %c0_i32 = arith.constant 0 : i32
    return %arg0, %arg1, %arg2, %arg3 : i32, i32, i32, i32
  }
}

</mosaic_0001>

<llo_original>
// kernel: tpu_custom_call.1
$region0: #{tpu_custom_call.1}
  #allocation0 [shape = 'u32[]', space=smem, size = 0x4, offset = 0x4, fixed_abs, tag = 'smem constant byte address 0x4 - core index']
  #allocation1 [shape = 'u32[144,128]{1,0:T(1,128)}', space=vmem, size = 0x12000, scoped, tag = 'internal scratch']
  #allocation2 [shape = 'f32[8,512]{1,0:T(8,128)}', space=vmem, size = 0x4000, scoped, tag = 'scratch operand']
  %s0 = inlined_call_operand.hbm [shape: f32[2,8,128], index: 0, kind: input, shape index: {}]
  %s1 = inlined_call_operand.hbm [shape: f32[128,512], index: 1, kind: input, shape index: {}]
  %s2 = inlined_call_operand.hbm [shape: f32[2,8,128], index: 2, kind: input, shape index: {}]
  %s3 = inlined_call_operand.hbm [shape: f32[2,4,8,8], index: 3, kind: output, shape index: {}]
  %s4 = sld [smem:[#allocation0]]
  $region61: #{tpu_custom_call.1} parent=0
    _
  %s6 = ssub.s32 1, %s4
  %s7 = scalar_select 0, %s6, %s4
  $region1: #{tpu_custom_call.1} parent=0
    #allocation3 [shape = 'u8[8192]{0}', space=vmem, size = 0x2000, scoped, tag = 'input window, operand 0']
    #allocation4 [shape = 's32[2]{0}', space=sflag, size = 0x8, scoped, tag = 'scoped memory for tpu_custom_call.1']
    #allocation5 [shape = 's32[2]{0}', space=sflag, size = 0x8, scoped, tag = 'scoped memory for tpu_custom_call.1']
    #allocation6 [shape = 'u8[262144]{0}', space=vmem, size = 0x40000, scoped, tag = 'input window, operand 1, single buffered']
    #allocation7 [shape = 's32[1]{0}', space=sflag, size = 0x4, scoped, tag = 'scoped memory for tpu_custom_call.1']
    #allocation8 [shape = 'u8[8192]{0}', space=vmem, size = 0x2000, scoped, tag = 'input window, operand 2']
    #allocation9 [shape = 'u8[32768]{0}', space=vmem, size = 0x8000, scoped, tag = 'output window, operand 0']
    %8 = vsyncpa [#allocation4], 0
    %s9 = scalar_lea.sflag [#allocation4], 1
    %10 = vsyncpa %s9, 0
    %11 = vsyncpa [#allocation7], 0
    %12 = vsyncpa [#allocation5], 0
    %s13 = scalar_lea.sflag [#allocation5], 1
    %14 = vsyncpa %s13, 0
    loop: start=0, step=1, limit=4
    $region2: #{tpu_custom_call.1} parent=1 // loop_pre_header
      _
    $region3: #{tpu_custom_call.1} parent=1 // loop_header
      %s16 = sphi 0, %s20
      %p17 = scmp.ge.s32.totalorder %s16, 4
      %s23 = sphi 0, %s49
      %s24 = sphi 0, %s45
      %s25 = sphi 0, %s41
      %s26 = sphi 0, %s37
      %s27 = sphi 0, %s23
      %s28 = sphi 0, %s24
      %s29 = sphi 0, %s25
      %s30 = sphi 0, %s26
      %s31 = sphi 0, %s27
      %s32 = sphi 0, %s28
      %s33 = sphi 0, %s29
      %s34 = sphi 0, %s30
      %s54 = sphi 0, %s56
      %s57 = sphi 0, %s54
      %s58 = sphi 0, %s57
      %s74 = sphi 0, %s58
      %s80 = sphi 0, %s82
      %s83 = sphi 0, %s80
      %s84 = sphi 0, %s83
      %s100 = sphi 0, %s84
      %s108 = sphi 0, %s110
      %s111 = sphi 0, %s108
      %s112 = sphi 0, %s111
      %s128 = sphi 0, %s112
      %s140 = sphi 0, %s142
      %s143 = sphi 0, %s140
      %s144 = sphi 0, %s143
      %s160 = sphi 0, %s144
    $region4: #{tpu_custom_call.1} parent=1 // loop_header_branch
      %19 = sbr.rel (%p17) target = $region8
    $region5: #{tpu_custom_call.1} parent=1 // loop_body
      %s21 = ssub.s32 %s16, 1
      %s22 = ssub.s32 %s16, 2
      %s35 = sadd.s32 1, %s26
      %p36 = scmp.ge.s32.totalorder %s35, 1
      %s37 = scalar_select %p36, 0, %s35
      %s38 = sadd.s32 1, %s25
      %s39 = scalar_select %p36, %s38, %s25
      %p40 = scmp.ge.s32.totalorder %s39, 1
      %s41 = scalar_select %p40, 0, %s39
      %s42 = sadd.s32 1, %s24
      %s43 = scalar_select %p40, %s42, %s24
      %p44 = scmp.ge.s32.totalorder %s43, 1
      %s45 = scalar_select %p44, 0, %s43
      %s46 = sadd.s32 1, %s23
      %s47 = scalar_select %p44, %s46, %s23
      %p48 = scmp.ge.s32.totalorder %s47, 2
      %s49 = scalar_select %p48, 0, %s47
      %s50 = ssub.s32 %s23, %s49
      %s51 = ssub.s32 %s25, %s41
      %s52 = sor.u32 %s50, %s51
      %p53 = scmp.eq.s32.totalorder %s52, 0
      %s55 = sadd.s32 %s54, 1
      %s56 = scalar_select %p53, %s54, %s55
      %p59 = pneg %p53
      %p60 = scmp.eq.s32.totalorder %s16, 1
      %p61 = por %p59, %p60
      %p62 = scmp.ne.s32.totalorder %s54, %s57
      %p63 = scmp.eq.s32.totalorder %s16, 0
      %p64 = por %p62, %p63
      %p65 = scmp.ne.s32.totalorder %s54, %s57
      %p66 = scmp.eq.s32.totalorder %s21, 1
      %p67 = por %p65, %p66
      %p68 = scmp.ne.s32.totalorder %s57, %s58
      %p69 = scmp.eq.s32.totalorder %s21, 0
      %p70 = por %p68, %p69
      %p71 = scmp.ne.s32.totalorder %s57, %s58
      %p72 = scmp.eq.s32.totalorder %s22, 1
      %p73 = por %p71, %p72
      %p75 = scmp.ne.s32.totalorder %s58, %s74
      %p76 = scmp.eq.s32.totalorder %s22, 0
      %p77 = por %p75, %p76
      %s78 = ssub.s32 %s24, %s45
      %p79 = scmp.eq.s32.totalorder %s78, 0
      %s81 = sadd.s32 %s80, 1
      %s82 = scalar_select %p79, %s80, %s81
      %p85 = pneg %p79
      %p86 = scmp.eq.s32.totalorder %s16, 1
      %p87 = por %p85, %p86
      %p88 = scmp.ne.s32.totalorder %s80, %s83
      %p89 = scmp.eq.s32.totalorder %s16, 0
      %p90 = por %p88, %p89
      %p91 = scmp.ne.s32.totalorder %s80, %s83
      %p92 = scmp.eq.s32.totalorder %s21, 1
      %p93 = por %p91, %p92
      %p94 = scmp.ne.s32.totalorder %s83, %s84
      %p95 = scmp.eq.s32.totalorder %s21, 0
      %p96 = por %p94, %p95
      %p97 = scmp.ne.s32.totalorder %s83, %s84
      %p98 = scmp.eq.s32.totalorder %s22, 1
      %p99 = por %p97, %p98
      %p101 = scmp.ne.s32.totalorder %s84, %s100
      %p102 = scmp.eq.s32.totalorder %s22, 0
      %p103 = por %p101, %p102
      %s104 = ssub.s32 %s23, %s49
      %s105 = ssub.s32 %s26, %s37
      %s106 = sor.u32 %s104, %s105
      %p107 = scmp.eq.s32.totalorder %s106, 0
      %s109 = sadd.s32 %s108, 1
      %s110 = scalar_select %p107, %s108, %s109
      %p113 = pneg %p107
      %p114 = scmp.eq.s32.totalorder %s16, 1
      %p115 = por %p113, %p114
      %p116 = scmp.ne.s32.totalorder %s108, %s111
      %p117 = scmp.eq.s32.totalorder %s16, 0
      %p118 = por %p116, %p117
      %p119 = scmp.ne.s32.totalorder %s108, %s111
      %p120 = scmp.eq.s32.totalorder %s21, 1
      %p121 = por %p119, %p120
      %p122 = scmp.ne.s32.totalorder %s111, %s112
      %p123 = scmp.eq.s32.totalorder %s21, 0
      %p124 = por %p122, %p123
      %p125 = scmp.ne.s32.totalorder %s111, %s112
      %p126 = scmp.eq.s32.totalorder %s22, 1
      %p127 = por %p125, %p126
      %p129 = scmp.ne.s32.totalorder %s112, %s128
      %p130 = scmp.eq.s32.totalorder %s22, 0
      %p131 = por %p129, %p130
      %s132 = ssub.s32 %s23, %s49
      %s133 = ssub.s32 %s24, %s45
      %s134 = sor.u32 %s132, %s133
      %s135 = ssub.s32 %s25, %s41
      %s136 = sor.u32 %s134, %s135
      %s137 = ssub.s32 %s26, %s37
      %s138 = sor.u32 %s136, %s137
      %p139 = scmp.eq.s32.totalorder %s138, 0
      %s141 = sadd.s32 %s140, 1
      %s142 = scalar_select %p139, %s140, %s141
      %p145 = pneg %p139
      %p146 = scmp.eq.s32.totalorder %s16, 1
      %p147 = por %p145, %p146
      %p148 = scmp.ne.s32.totalorder %s140, %s143
      %p149 = scmp.eq.s32.totalorder %s16, 0
      %p150 = por %p148, %p149
      %p151 = scmp.ne.s32.totalorder %s140, %s143
      %p152 = scmp.eq.s32.totalorder %s21, 1
      %p153 = por %p151, %p152
      %p154 = scmp.ne.s32.totalorder %s143, %s144
      %p155 = scmp.eq.s32.totalorder %s21, 0
      %p156 = por %p154, %p155
      %p157 = scmp.ne.s32.totalorder %s143, %s144
      %p158 = scmp.eq.s32.totalorder %s22, 1
      %p159 = por %p157, %p158
      %p161 = scmp.ne.s32.totalorder %s144, %s160
      %p162 = scmp.eq.s32.totalorder %s22, 0
      %p163 = por %p161, %p162
      %p164 = scmp.le.s32.totalorder 1, %s16
      %p165 = scmp.lt.s32.totalorder %s16, 3
      %p166 = pnand %p164, %p165
      %p167 = pneg %p166
      // Predicated region
      $region9: #{tpu_custom_call.1} parent=5 // pred_check
        _
      $region10: #{tpu_custom_call.1} parent=5 // pred_check_branch
        %169 = sbr.rel (%p166) target = $region12
      $region11: #{tpu_custom_call.1} parent=5 // pred_region
        %s170 = ssub.s32 %s16, 1
        // Predicated region
        $region13: #{tpu_custom_call.1} parent=11 // pred_check
          %p171 = pneg %p96
        $region14: #{tpu_custom_call.1} parent=11 // pred_check_branch
          %173 = sbr.rel (%p171) target = $region16
        $region15: #{tpu_custom_call.1} parent=11 // pred_region
          %s174 = smul.u32 4, %s28
          %s176 = ssub.s32 8192, 8192
          %177 = vsyncadd [#allocation7], %s176
          %s178 = smul.addr %s174, 128
          %s179 = scalar_lea.hbm %s1, %s178
          %s180 = sshll.u32 [#allocation6], 4
          %s181 = int_to_ptr.vmem [resolvable:$true] %s180
          %186 = dma.hbm_to_vmem [thread:$0]  %s179, 8192, %s181, [#allocation7], 512, 512, 32
        $region16: #{tpu_custom_call.1} parent=11 // pred_fallthru
          _
      $region12: #{tpu_custom_call.1} parent=5 // pred_fallthru
        _
      %p187 = scmp.lt.s32.totalorder %s16, 2
      // Predicated region
      $region17: #{tpu_custom_call.1} parent=5 // pred_check
        %p188 = pneg %p187
      $region18: #{tpu_custom_call.1} parent=5 // pred_check_branch
        %190 = sbr.rel (%p188) target = $region20
      $region19: #{tpu_custom_call.1} parent=5 // pred_region
        // Predicated region
        $region21: #{tpu_custom_call.1} parent=19 // pred_check
          %p191 = pneg %p64
        $region22: #{tpu_custom_call.1} parent=19 // pred_check_branch
          %193 = sbr.rel (%p191) target = $region24
        $region23: #{tpu_custom_call.1} parent=19 // pred_region
          %s194 = sand.u32 %s16, 1
          %s195 = scalar_lea.sflag [#allocation4], %s194
          %s196 = sand.u32 %s54, 1
          %s197 = smul.addr %s196, 8
          %s198 = scalar_lea.vmem [#allocation3], %s197
          %s200 = ssub.s32 128, 128
          %201 = vsyncadd %s195, %s200
          %s202 = sadd.s32 %s25, %s23
          %s203 = smul.addr %s202, 128
          %s204 = scalar_lea.hbm %s0, %s203
          %s206 = sshll.u32 %s198, 4
          %s207 = int_to_ptr.vmem [resolvable:$true] %s206
          %209 = dma.hbm_to_vmem [thread:$0]  %s204, 128, %s207, %s195
        $region24: #{tpu_custom_call.1} parent=19 // pred_fallthru
          _
        // Predicated region
        $region25: #{tpu_custom_call.1} parent=19 // pred_check
          %p210 = pneg %p118
        $region26: #{tpu_custom_call.1} parent=19 // pred_check_branch
          %212 = sbr.rel (%p210) target = $region28
        $region27: #{tpu_custom_call.1} parent=19 // pred_region
          %s213 = sand.u32 %s16, 1
          %s214 = scalar_lea.sflag [#allocation4], %s213
          %s215 = sand.u32 %s108, 1
          %s216 = smul.addr %s215, 8
          %s217 = scalar_lea.vmem [#allocation8], %s216
          %s219 = ssub.s32 128, 128
          %220 = vsyncadd %s214, %s219
          %s221 = sadd.s32 %s26, %s23
          %s222 = smul.addr %s221, 128
          %s223 = scalar_lea.hbm %s2, %s222
          %s225 = sshll.u32 %s217, 4
          %s226 = int_to_ptr.vmem [resolvable:$true] %s225
          %228 = dma.hbm_to_vmem [thread:$0]  %s223, 128, %s226, %s214
        $region28: #{tpu_custom_call.1} parent=19 // pred_fallthru
          _
      $region20: #{tpu_custom_call.1} parent=5 // pred_fallthru
        _
      %p229 = scmp.le.s32.totalorder 1, %s16
      %p230 = scmp.lt.s32.totalorder %s16, 3
      %p231 = pnand %p229, %p230
      %p232 = pneg %p231
      // Predicated region
      $region29: #{tpu_custom_call.1} parent=5 // pred_check
        _
      $region30: #{tpu_custom_call.1} parent=5 // pred_check_branch
        %234 = sbr.rel (%p231) target = $region32
      $region31: #{tpu_custom_call.1} parent=5 // pred_region
        %s235 = ssub.s32 %s16, 1
        %s236 = sand.u32 %s21, 1
        %s237 = scalar_lea.sflag [#allocation4], %s236
        %s238 = sand.u32 %s57, 1
        %s239 = smul.addr %s238, 8
        %s240 = scalar_lea.vmem [#allocation3], %s239
        // Predicated region
        $region33: #{tpu_custom_call.1} parent=31 // pred_check
          %p241 = pneg %p70
        $region34: #{tpu_custom_call.1} parent=31 // pred_check_branch
          %243 = sbr.rel (%p241) target = $region36
        $region35: #{tpu_custom_call.1} parent=31 // pred_region
          %244 = dma.done %s237, 128
        $region36: #{tpu_custom_call.1} parent=31 // pred_fallthru
          _
        // Predicated region
        $region37: #{tpu_custom_call.1} parent=31 // pred_check
          %p245 = pneg %p96
        $region38: #{tpu_custom_call.1} parent=31 // pred_check_branch
          %247 = sbr.rel (%p245) target = $region40
        $region39: #{tpu_custom_call.1} parent=31 // pred_region
          %248 = dma.done [#allocation7], 8192
        $region40: #{tpu_custom_call.1} parent=31 // pred_fallthru
          _
        %s249 = sand.u32 %s21, 1
        %s250 = scalar_lea.sflag [#allocation4], %s249
        %s251 = sand.u32 %s111, 1
        %s252 = smul.addr %s251, 8
        %s253 = scalar_lea.vmem [#allocation8], %s252
        // Predicated region
        $region41: #{tpu_custom_call.1} parent=31 // pred_check
          %p254 = pneg %p124
        $region42: #{tpu_custom_call.1} parent=31 // pred_check_branch
          %256 = sbr.rel (%p254) target = $region44
        $region43: #{tpu_custom_call.1} parent=31 // pred_region
          %257 = dma.done %s250, 128
        $region44: #{tpu_custom_call.1} parent=31 // pred_fallthru
          _
        %s258 = sand.u32 %s21, 1
        %s259 = scalar_lea.sflag [#allocation4], %s258
        %s260 = sand.u32 %s57, 1
        %s261 = smul.addr %s260, 8
        %s262 = scalar_lea.vmem [#allocation3], %s261
        %p263 = pneg %p70
        %p264 = pneg %p67
        %p265 = pneg %p96
        %p266 = pneg %p93
        %s267 = sand.u32 %s21, 1
        %s268 = scalar_lea.sflag [#allocation4], %s267
        %s269 = sand.u32 %s111, 1
        %s270 = smul.addr %s269, 8
        %s271 = scalar_lea.vmem [#allocation8], %s270
        %p272 = pneg %p124
        %p273 = pneg %p121
        %p274 = pneg %p156
        %p275 = pneg %p153
        %s276 = sand.u32 %s143, 1
        %s277 = scalar_lea.sflag [#allocation5], %s276
        %s278 = sand.u32 %s143, 1
        %s279 = smul.addr %s278, 32
        %s280 = scalar_lea.vmem [#allocation9], %s279
        %s281 = smul.u32 4, %s28
        %s282 = smul.u32 4, %s28
        %p283 = scmp.eq.s32.totalorder %s30, 0
        // Predicated region
        $region45: #{tpu_custom_call.1} parent=31 // pred_check
          %p284 = pneg %p283
        $region46: #{tpu_custom_call.1} parent=31 // pred_check_branch
          %286 = sbr.rel (%p284) target = $region48
        $region47: #{tpu_custom_call.1} parent=31 // pred_region
          %v287 = vld [vmem:[%s240] sm:$0xff]
          %v288 = vld [vmem:[#allocation6] sm:$0xff]
          %v289 = vld [vmem:[#allocation6 + $0x8] sm:$0xff]
          %v290 = vld [vmem:[#allocation6 + $0x10] sm:$0xff]
          %v291 = vld [vmem:[#allocation6 + $0x18] sm:$0xff]
          %v292 = vld [vmem:[#allocation6 + $0x20] sm:$0xff]
          %v293 = vld [vmem:[#allocation6 + $0x28] sm:$0xff]
          %v294 = vld [vmem:[#allocation6 + $0x30] sm:$0xff]
          %v295 = vld [vmem:[#allocation6 + $0x38] sm:$0xff]
          %v296 = vld [vmem:[#allocation6 + $0x40] sm:$0xff]
          %v297 = vld [vmem:[#allocation6 + $0x48] sm:$0xff]
          %v298 = vld [vmem:[#allocation6 + $0x50] sm:$0xff]
          %v299 = vld [vmem:[#allocation6 + $0x58] sm:$0xff]
          %v300 = vld [vmem:[#allocation6 + $0x60] sm:$0xff]
          %v301 = vld [vmem:[#allocation6 + $0x68] sm:$0xff]
          %v302 = vld [vmem:[#allocation6 + $0x70] sm:$0xff]
          %v303 = vld [vmem:[#allocation6 + $0x78] sm:$0xff]
          %v304 = vld [vmem:[#allocation6 + $0x80] sm:$0xff]
          %v305 = vld [vmem:[#allocation6 + $0x88] sm:$0xff]
          %v306 = vld [vmem:[#allocation6 + $0x90] sm:$0xff]
          %v307 = vld [vmem:[#allocation6 + $0x98] sm:$0xff]
          %v308 = vld [vmem:[#allocation6 + $0xa0] sm:$0xff]
          %v309 = vld [vmem:[#allocation6 + $0xa8] sm:$0xff]
          %v310 = vld [vmem:[#allocation6 + $0xb0] sm:$0xff]
          %v311 = vld [vmem:[#allocation6 + $0xb8] sm:$0xff]
          %v312 = vld [vmem:[#allocation6 + $0xc0] sm:$0xff]
          %v313 = vld [vmem:[#allocation6 + $0xc8] sm:$0xff]
          %v314 = vld [vmem:[#allocation6 + $0xd0] sm:$0xff]
          %v315 = vld [vmem:[#allocation6 + $0xd8] sm:$0xff]
          %v316 = vld [vmem:[#allocation6 + $0xe0] sm:$0xff]
          %v317 = vld [vmem:[#allocation6 + $0xe8] sm:$0xff]
          %v318 = vld [vmem:[#allocation6 + $0xf0] sm:$0xff]
          %v319 = vld [vmem:[#allocation6 + $0xf8] sm:$0xff]
          %v320 = vld [vmem:[#allocation6 + $0x100] sm:$0xff]
          %v321 = vld [vmem:[#allocation6 + $0x108] sm:$0xff]
          %v322 = vld [vmem:[#allocation6 + $0x110] sm:$0xff]
          %v323 = vld [vmem:[#allocation6 + $0x118] sm:$0xff]
          %v324 = vld [vmem:[#allocation6 + $0x120] sm:$0xff]
          %v325 = vld [vmem:[#allocation6 + $0x128] sm:$0xff]
          %v326 = vld [vmem:[#allocation6 + $0x130] sm:$0xff]
          %v327 = vld [vmem:[#allocation6 + $0x138] sm:$0xff]
          %v328 = vld [vmem:[#allocation6 + $0x140] sm:$0xff]
          %v329 = vld [vmem:[#allocation6 + $0x148] sm:$0xff]
          %v330 = vld [vmem:[#allocation6 + $0x150] sm:$0xff]
          %v331 = vld [vmem:[#allocation6 + $0x158] sm:$0xff]
          %v332 = vld [vmem:[#allocation6 + $0x160] sm:$0xff]
          %v333 = vld [vmem:[#allocation6 + $0x168] sm:$0xff]
          %v334 = vld [vmem:[#allocation6 + $0x170] sm:$0xff]
          %v335 = vld [vmem:[#allocation6 + $0x178] sm:$0xff]
          %v336 = vld [vmem:[#allocation6 + $0x180] sm:$0xff]
          %v337 = vld [vmem:[#allocation6 + $0x188] sm:$0xff]
          %v338 = vld [vmem:[#allocation6 + $0x190] sm:$0xff]
          %v339 = vld [vmem:[#allocation6 + $0x198] sm:$0xff]
          %v340 = vld [vmem:[#allocation6 + $0x1a0] sm:$0xff]
          %v341 = vld [vmem:[#allocation6 + $0x1a8] sm:$0xff]
          %v342 = vld [vmem:[#allocation6 + $0x1b0] sm:$0xff]
          %v343 = vld [vmem:[#allocation6 + $0x1b8] sm:$0xff]
          %v344 = vld [vmem:[#allocation6 + $0x1c0] sm:$0xff]
          %v345 = vld [vmem:[#allocation6 + $0x1c8] sm:$0xff]
          %v346 = vld [vmem:[#allocation6 + $0x1d0] sm:$0xff]
          %v347 = vld [vmem:[#allocation6 + $0x1d8] sm:$0xff]
          %v348 = vld [vmem:[#allocation6 + $0x1e0] sm:$0xff]
          %v349 = vld [vmem:[#allocation6 + $0x1e8] sm:$0xff]
          %v350 = vld [vmem:[#allocation6 + $0x1f0] sm:$0xff]
          %v351 = vld [vmem:[#allocation6 + $0x1f8] sm:$0xff]
          %352 = vmatprep.subr.mxu0 %v289
          %353 = vmatpush1.msra.mxu0 %v288
          %354 = vmatprep.subr.mxu0 %v293
          %355 = vmatpush1.msra.mxu0 %v292
          %356 = vmatprep.subr.mxu0 %v297
          %357 = vmatpush1.msra.mxu0 %v296
          %358 = vmatprep.subr.mxu0 %v301
          %359 = vmatpush1.msra.mxu0 %v300
          %360 = vmatprep.subr.mxu0 %v305
          %361 = vmatpush1.msra.mxu0 %v304
          %362 = vmatprep.subr.mxu0 %v309
          %363 = vmatpush1.msra.mxu0 %v308
          %364 = vmatprep.subr.mxu0 %v313
          %365 = vmatpush1.msra.mxu0 %v312
          %366 = vmatprep.subr.mxu0 %v317
          %367 = vmatpush1.msra.mxu0 %v316
          %368 = vmatprep.subr.mxu0 %v321
          %369 = vmatpush1.msra.mxu0 %v320
          %370 = vmatprep.subr.mxu0 %v325
          %371 = vmatpush1.msra.mxu0 %v324
          %372 = vmatprep.subr.mxu0 %v329
          %373 = vmatpush1.msra.mxu0 %v328
          %374 = vmatprep.subr.mxu0 %v333
          %375 = vmatpush1.msra.mxu0 %v332
          %376 = vmatprep.subr.mxu0 %v337
          %377 = vmatpush1.msra.mxu0 %v336
          %378 = vmatprep.subr.mxu0 %v341
          %379 = vmatpush1.msra.mxu0 %v340
          %380 = vmatprep.subr.mxu0 %v345
          %381 = vmatpush1.msra.mxu0 %v344
          %382 = vmatprep.subr.mxu0 %v349
          %383 = vmatpush1.msra.mxu0 %v348
          %384 = vmatprep.subr.mxu0 0.0
          %385 = vmatpush1.msra.mxu0 0.0
          %386 = vmatprep.subr.mxu0 0.0
          %387 = vmatpush1.msra.mxu0 0.0
          %388 = vmatprep.subr.mxu0 0.0
          %389 = vmatpush1.msra.mxu0 0.0
          %390 = vmatprep.subr.mxu0 0.0
          %391 = vmatpush1.msra.mxu0 0.0
          %392 = vmatprep.subr.mxu0 0.0
          %393 = vmatpush1.msra.mxu0 0.0
          %394 = vmatprep.subr.mxu0 0.0
          %395 = vmatpush1.msra.mxu0 0.0
          %396 = vmatprep.subr.mxu0 0.0
          %397 = vmatpush1.msra.mxu0 0.0
          %398 = vmatprep.subr.mxu0 0.0
          %399 = vmatpush1.msra.mxu0 0.0
          %400 = vmatprep.subr.mxu0 0.0
          %401 = vmatpush1.msra.mxu0 0.0
          %402 = vmatprep.subr.mxu0 0.0
          %403 = vmatpush1.msra.mxu0 0.0
          %404 = vmatprep.subr.mxu0 0.0
          %405 = vmatpush1.msra.mxu0 0.0
          %406 = vmatprep.subr.mxu0 0.0
          %407 = vmatpush1.msra.mxu0 0.0
          %408 = vmatprep.subr.mxu0 0.0
          %409 = vmatpush1.msra.mxu0 0.0
          %410 = vmatprep.subr.mxu0 0.0
          %411 = vmatpush1.msra.mxu0 0.0
          %412 = vmatprep.subr.mxu0 0.0
          %413 = vmatpush1.msra.mxu0 0.0
          %414 = vmatprep.subr.mxu0 0.0
          %415 = vmatpush1.msra.mxu0 0.0
          %416 = vmatprep.mubr.f32.mxu0 0.0
          %417 = vmatmul.mubr.f32.gmra.mrb[0].mxu0 %v287
          %v418 = vpop.f32.mrb[0].mxu0
          %v419 = vadd.f32 0.0, %v418
          %v420 = vpop.f32.mrb[0].mxu0
          %v421 = vadd.f32 0.0, %v420
          %422 = vdwg.mxu0
          %423 = vmatprep.subr.mxu0 %v291
          %424 = vmatpush1.msra.mxu0 %v290
          %425 = vmatprep.subr.mxu0 %v295
          %426 = vmatpush1.msra.mxu0 %v294
          %427 = vmatprep.subr.mxu0 %v299
          %428 = vmatpush1.msra.mxu0 %v298
          %429 = vmatprep.subr.mxu0 %v303
          %430 = vmatpush1.msra.mxu0 %v302
          %431 = vmatprep.subr.mxu0 %v307
          %432 = vmatpush1.msra.mxu0 %v306
          %433 = vmatprep.subr.mxu0 %v311
          %434 = vmatpush1.msra.mxu0 %v310
          %435 = vmatprep.subr.mxu0 %v315
          %436 = vmatpush1.msra.mxu0 %v314
          %437 = vmatprep.subr.mxu0 %v319
          %438 = vmatpush1.msra.mxu0 %v318
          %439 = vmatprep.subr.mxu0 %v323
          %440 = vmatpush1.msra.mxu0 %v322
          %441 = vmatprep.subr.mxu0 %v327
          %442 = vmatpush1.msra.mxu0 %v326
          %443 = vmatprep.subr.mxu0 %v331
          %444 = vmatpush1.msra.mxu0 %v330
          %445 = vmatprep.subr.mxu0 %v335
          %446 = vmatpush1.msra.mxu0 %v334
          %447 = vmatprep.subr.mxu0 %v339
          %448 = vmatpush1.msra.mxu0 %v338
          %449 = vmatprep.subr.mxu0 %v343
          %450 = vmatpush1.msra.mxu0 %v342
          %451 = vmatprep.subr.mxu0 %v347
          %452 = vmatpush1.msra.mxu0 %v346
          %453 = vmatprep.subr.mxu0 %v351
          %454 = vmatpush1.msra.mxu0 %v350
          %455 = vmatprep.subr.mxu0 0.0
          %456 = vmatpush1.msra.mxu0 0.0
          %457 = vmatprep.subr.mxu0 0.0
          %458 = vmatpush1.msra.mxu0 0.0
          %459 = vmatprep.subr.mxu0 0.0
          %460 = vmatpush1.msra.mxu0 0.0
          %461 = vmatprep.subr.mxu0 0.0
          %462 = vmatpush1.msra.mxu0 0.0
          %463 = vmatprep.subr.mxu0 0.0
          %464 = vmatpush1.msra.mxu0 0.0
          %465 = vmatprep.subr.mxu0 0.0
          %466 = vmatpush1.msra.mxu0 0.0
          %467 = vmatprep.subr.mxu0 0.0
          %468 = vmatpush1.msra.mxu0 0.0
          %469 = vmatprep.subr.mxu0 0.0
          %470 = vmatpush1.msra.mxu0 0.0
          %471 = vmatprep.subr.mxu0 0.0
          %472 = vmatpush1.msra.mxu0 0.0
          %473 = vmatprep.subr.mxu0 0.0
          %474 = vmatpush1.msra.mxu0 0.0
          %475 = vmatprep.subr.mxu0 0.0
          %476 = vmatpush1.msra.mxu0 0.0
          %477 = vmatprep.subr.mxu0 0.0
          %478 = vmatpush1.msra.mxu0 0.0
          %479 = vmatprep.subr.mxu0 0.0
          %480 = vmatpush1.msra.mxu0 0.0
          %481 = vmatprep.subr.mxu0 0.0
          %482 = vmatpush1.msra.mxu0 0.0
          %483 = vmatprep.subr.mxu0 0.0
          %484 = vmatpush1.msra.mxu0 0.0
          %485 = vmatprep.subr.mxu0 0.0
          %486 = vmatpush1.msra.mxu0 0.0
          %487 = vmatprep.mubr.f32.mxu0 0.0
          %488 = vmatmul.mubr.f32.gmra.mrb[0].mxu0 %v287
          %v489 = vpop.f32.mrb[0].mxu0
          %v490 = vadd.f32 0.0, %v489
          %v491 = vpop.f32.mrb[0].mxu0
          %v492 = vadd.f32 0.0, %v491
          %493 = vdwg.mxu0
          %494 = vst [vmem:[#allocation2] sm:$0xff] %v419
          %495 = vst [vmem:[#allocation2 + $0x8] sm:$0xff] %v421
          %496 = vst [vmem:[#allocation2 + $0x10] sm:$0xff] %v490
          %497 = vst [vmem:[#allocation2 + $0x18] sm:$0xff] %v492
        $region48: #{tpu_custom_call.1} parent=31 // pred_fallthru
          _
        %v498 = vld [vmem:[%s253] sm:$0xff]
        %v499 = vld [vmem:[#allocation2] sm:$0xff]
        %500 = vmatprep.subr.mxu0 0.0
        %501 = vmatpush1.xpose.msra.mxu0 %v498
        %502 = vmatprep.subr.mxu0 0.0
        %503 = vmatpush1.xpose.msra.mxu0 0.0
        %504 = vmatprep.subr.mxu0 0.0
        %505 = vmatpush1.xpose.msra.mxu0 0.0
        %506 = vmatprep.subr.mxu0 0.0
        %507 = vmatpush1.xpose.msra.mxu0 0.0
        %508 = vmatprep.subr.mxu0 0.0
        %509 = vmatpush1.xpose.msra.mxu0 0.0
        %510 = vmatprep.subr.mxu0 0.0
        %511 = vmatpush1.xpose.msra.mxu0 0.0
        %512 = vmatprep.subr.mxu0 0.0
        %513 = vmatpush1.xpose.msra.mxu0 0.0
        %514 = vmatprep.subr.mxu0 0.0
        %515 = vmatpush1.xpose.msra.mxu0 0.0
        %516 = vmatprep.subr.mxu0 0.0
        %517 = vmatpush1.xpose.msra.mxu0 0.0
        %518 = vmatprep.subr.mxu0 0.0
        %519 = vmatpush1.xpose.msra.mxu0 0.0
        %520 = vmatprep.subr.mxu0 0.0
        %521 = vmatpush1.xpose.msra.mxu0 0.0
        %522 = vmatprep.subr.mxu0 0.0
        %523 = vmatpush1.xpose.msra.mxu0 0.0
        %524 = vmatprep.subr.mxu0 0.0
        %525 = vmatpush1.xpose.msra.mxu0 0.0
        %526 = vmatprep.subr.mxu0 0.0
        %527 = vmatpush1.xpose.msra.mxu0 0.0
        %528 = vmatprep.subr.mxu0 0.0
        %529 = vmatpush1.xpose.msra.mxu0 0.0
        %530 = vmatprep.subr.mxu0 0.0
        %531 = vmatpush1.xpose.msra.mxu0 0.0
        %532 = vmatprep.subr.mxu0 0.0
        %533 = vmatpush1.xpose.msra.mxu0 0.0
        %534 = vmatprep.subr.mxu0 0.0
        %535 = vmatpush1.xpose.msra.mxu0 0.0
        %536 = vmatprep.subr.mxu0 0.0
        %537 = vmatpush1.xpose.msra.mxu0 0.0
        %538 = vmatprep.subr.mxu0 0.0
        %539 = vmatpush1.xpose.msra.mxu0 0.0
        %540 = vmatprep.subr.mxu0 0.0
        %541 = vmatpush1.xpose.msra.mxu0 0.0
        %542 = vmatprep.subr.mxu0 0.0
        %543 = vmatpush1.xpose.msra.mxu0 0.0
        %544 = vmatprep.subr.mxu0 0.0
        %545 = vmatpush1.xpose.msra.mxu0 0.0
        %546 = vmatprep.subr.mxu0 0.0
        %547 = vmatpush1.xpose.msra.mxu0 0.0
        %548 = vmatprep.subr.mxu0 0.0
        %549 = vmatpush1.xpose.msra.mxu0 0.0
        %550 = vmatprep.subr.mxu0 0.0
        %551 = vmatpush1.xpose.msra.mxu0 0.0
        %552 = vmatprep.subr.mxu0 0.0
        %553 = vmatpush1.xpose.msra.mxu0 0.0
        %554 = vmatprep.subr.mxu0 0.0
        %555 = vmatpush1.xpose.msra.mxu0 0.0
        %556 = vmatprep.subr.mxu0 0.0
        %557 = vmatpush1.xpose.msra.mxu0 0.0
        %558 = vmatprep.subr.mxu0 0.0
        %559 = vmatpush1.xpose.msra.mxu0 0.0
        %560 = vmatprep.subr.mxu0 0.0
        %561 = vmatpush1.xpose.msra.mxu0 0.0
        %562 = vmatprep.subr.mxu0 0.0
        %563 = vmatpush1.xpose.msra.mxu0 0.0
        %564 = vmatprep.mubr.f32.mxu0 0.0
        %565 = vmatmul.mubr.f32.gmra.mrb[0].mxu0 %v499
        %v566 = vpop.f32.mrb[0].mxu0
        %v567 = vadd.f32 0.0, %v566
        %v568 = vpop.f32.mrb[0].mxu0
        %569 = vdwg.mxu0
        %vm570 = vcmask 64512
        %571 = vst.msk [vmem:[%s280] sm:$0xff] %vm570, %v567
        %v572 = vld [vmem:[#allocation2 + $0x8] sm:$0xff]
        %573 = vmatprep.subr.mxu0 0.0
        %574 = vmatpush1.xpose.msra.mxu0 %v498
        %575 = vmatprep.subr.mxu0 0.0
        %576 = vmatpush1.xpose.msra.mxu0 0.0
        %577 = vmatprep.subr.mxu0 0.0
        %578 = vmatpush1.xpose.msra.mxu0 0.0
        %579 = vmatprep.subr.mxu0 0.0
        %580 = vmatpush1.xpose.msra.mxu0 0.0
        %581 = vmatprep.subr.mxu0 0.0
        %582 = vmatpush1.xpose.msra.mxu0 0.0
        %583 = vmatprep.subr.mxu0 0.0
        %584 = vmatpush1.xpose.msra.mxu0 0.0
        %585 = vmatprep.subr.mxu0 0.0
        %586 = vmatpush1.xpose.msra.mxu0 0.0
        %587 = vmatprep.subr.mxu0 0.0
        %588 = vmatpush1.xpose.msra.mxu0 0.0
        %589 = vmatprep.subr.mxu0 0.0
        %590 = vmatpush1.xpose.msra.mxu0 0.0
        %591 = vmatprep.subr.mxu0 0.0
        %592 = vmatpush1.xpose.msra.mxu0 0.0
        %593 = vmatprep.subr.mxu0 0.0
        %594 = vmatpush1.xpose.msra.mxu0 0.0
        %595 = vmatprep.subr.mxu0 0.0
        %596 = vmatpush1.xpose.msra.mxu0 0.0
        %597 = vmatprep.subr.mxu0 0.0
        %598 = vmatpush1.xpose.msra.mxu0 0.0
        %599 = vmatprep.subr.mxu0 0.0
        %600 = vmatpush1.xpose.msra.mxu0 0.0
        %601 = vmatprep.subr.mxu0 0.0
        %602 = vmatpush1.xpose.msra.mxu0 0.0
        %603 = vmatprep.subr.mxu0 0.0
        %604 = vmatpush1.xpose.msra.mxu0 0.0
        %605 = vmatprep.subr.mxu0 0.0
        %606 = vmatpush1.xpose.msra.mxu0 0.0
        %607 = vmatprep.subr.mxu0 0.0
        %608 = vmatpush1.xpose.msra.mxu0 0.0
        %609 = vmatprep.subr.mxu0 0.0
        %610 = vmatpush1.xpose.msra.mxu0 0.0
        %611 = vmatprep.subr.mxu0 0.0
        %612 = vmatpush1.xpose.msra.mxu0 0.0
        %613 = vmatprep.subr.mxu0 0.0
        %614 = vmatpush1.xpose.msra.mxu0 0.0
        %615 = vmatprep.subr.mxu0 0.0
        %616 = vmatpush1.xpose.msra.mxu0 0.0
        %617 = vmatprep.subr.mxu0 0.0
        %618 = vmatpush1.xpose.msra.mxu0 0.0
        %619 = vmatprep.subr.mxu0 0.0
        %620 = vmatpush1.xpose.msra.mxu0 0.0
        %621 = vmatprep.subr.mxu0 0.0
        %622 = vmatpush1.xpose.msra.mxu0 0.0
        %623 = vmatprep.subr.mxu0 0.0
        %624 = vmatpush1.xpose.msra.mxu0 0.0
        %625 = vmatprep.subr.mxu0 0.0
        %626 = vmatpush1.xpose.msra.mxu0 0.0
        %627 = vmatprep.subr.mxu0 0.0
        %628 = vmatpush1.xpose.msra.mxu0 0.0
        %629 = vmatprep.subr.mxu0 0.0
        %630 = vmatpush1.xpose.msra.mxu0 0.0
        %631 = vmatprep.subr.mxu0 0.0
        %632 = vmatpush1.xpose.msra.mxu0 0.0
        %633 = vmatprep.subr.mxu0 0.0
        %634 = vmatpush1.xpose.msra.mxu0 0.0
        %635 = vmatprep.subr.mxu0 0.0
        %636 = vmatpush1.xpose.msra.mxu0 0.0
        %637 = vmatprep.mubr.f32.mxu0 0.0
        %638 = vmatmul.mubr.f32.gmra.mrb[0].mxu0 %v572
        %v639 = vpop.f32.mrb[0].mxu0
        %v640 = vadd.f32 0.0, %v639
        %v641 = vpop.f32.mrb[0].mxu0
        %642 = vdwg.mxu0
        %s643 = scalar_lea.vmem %s280, 8 [#allocation9]
        %644 = vst.msk [vmem:[%s643] sm:$0xff] %vm570, %v640
        %v645 = vld [vmem:[#allocation2 + $0x10] sm:$0xff]
        %646 = vmatprep.subr.mxu0 0.0
        %647 = vmatpush1.xpose.msra.mxu0 %v498
        %648 = vmatprep.subr.mxu0 0.0
        %649 = vmatpush1.xpose.msra.mxu0 0.0
        %650 = vmatprep.subr.mxu0 0.0
        %651 = vmatpush1.xpose.msra.mxu0 0.0
        %652 = vmatprep.subr.mxu0 0.0
        %653 = vmatpush1.xpose.msra.mxu0 0.0
        %654 = vmatprep.subr.mxu0 0.0
        %655 = vmatpush1.xpose.msra.mxu0 0.0
        %656 = vmatprep.subr.mxu0 0.0
        %657 = vmatpush1.xpose.msra.mxu0 0.0
        %658 = vmatprep.subr.mxu0 0.0
        %659 = vmatpush1.xpose.msra.mxu0 0.0
        %660 = vmatprep.subr.mxu0 0.0
        %661 = vmatpush1.xpose.msra.mxu0 0.0
        %662 = vmatprep.subr.mxu0 0.0
        %663 = vmatpush1.xpose.msra.mxu0 0.0
        %664 = vmatprep.subr.mxu0 0.0
        %665 = vmatpush1.xpose.msra.mxu0 0.0
        %666 = vmatprep.subr.mxu0 0.0
        %667 = vmatpush1.xpose.msra.mxu0 0.0
        %668 = vmatprep.subr.mxu0 0.0
        %669 = vmatpush1.xpose.msra.mxu0 0.0
        %670 = vmatprep.subr.mxu0 0.0
        %671 = vmatpush1.xpose.msra.mxu0 0.0
        %672 = vmatprep.subr.mxu0 0.0
        %673 = vmatpush1.xpose.msra.mxu0 0.0
        %674 = vmatprep.subr.mxu0 0.0
        %675 = vmatpush1.xpose.msra.mxu0 0.0
        %676 = vmatprep.subr.mxu0 0.0
        %677 = vmatpush1.xpose.msra.mxu0 0.0
        %678 = vmatprep.subr.mxu0 0.0
        %679 = vmatpush1.xpose.msra.mxu0 0.0
        %680 = vmatprep.subr.mxu0 0.0
        %681 = vmatpush1.xpose.msra.mxu0 0.0
        %682 = vmatprep.subr.mxu0 0.0
        %683 = vmatpush1.xpose.msra.mxu0 0.0
        %684 = vmatprep.subr.mxu0 0.0
        %685 = vmatpush1.xpose.msra.mxu0 0.0
        %686 = vmatprep.subr.mxu0 0.0
        %687 = vmatpush1.xpose.msra.mxu0 0.0
        %688 = vmatprep.subr.mxu0 0.0
        %689 = vmatpush1.xpose.msra.mxu0 0.0
        %690 = vmatprep.subr.mxu0 0.0
        %691 = vmatpush1.xpose.msra.mxu0 0.0
        %692 = vmatprep.subr.mxu0 0.0
        %693 = vmatpush1.xpose.msra.mxu0 0.0
        %694 = vmatprep.subr.mxu0 0.0
        %695 = vmatpush1.xpose.msra.mxu0 0.0
        %696 = vmatprep.subr.mxu0 0.0
        %697 = vmatpush1.xpose.msra.mxu0 0.0
        %698 = vmatprep.subr.mxu0 0.0
        %699 = vmatpush1.xpose.msra.mxu0 0.0
        %700 = vmatprep.subr.mxu0 0.0
        %701 = vmatpush1.xpose.msra.mxu0 0.0
        %702 = vmatprep.subr.mxu0 0.0
        %703 = vmatpush1.xpose.msra.mxu0 0.0
        %704 = vmatprep.subr.mxu0 0.0
        %705 = vmatpush1.xpose.msra.mxu0 0.0
        %706 = vmatprep.subr.mxu0 0.0
        %707 = vmatpush1.xpose.msra.mxu0 0.0
        %708 = vmatprep.subr.mxu0 0.0
        %709 = vmatpush1.xpose.msra.mxu0 0.0
        %710 = vmatprep.mubr.f32.mxu0 0.0
        %711 = vmatmul.mubr.f32.gmra.mrb[0].mxu0 %v645
        %v712 = vpop.f32.mrb[0].mxu0
        %v713 = vadd.f32 0.0, %v712
        %v714 = vpop.f32.mrb[0].mxu0
        %715 = vdwg.mxu0
        %s716 = scalar_lea.vmem %s280, 16 [#allocation9]
        %717 = vst.msk [vmem:[%s716] sm:$0xff] %vm570, %v713
        %v718 = vld [vmem:[#allocation2 + $0x18] sm:$0xff]
        %719 = vmatprep.subr.mxu0 0.0
        %720 = vmatpush1.xpose.msra.mxu0 %v498
        %721 = vmatprep.subr.mxu0 0.0
        %722 = vmatpush1.xpose.msra.mxu0 0.0
        %723 = vmatprep.subr.mxu0 0.0
        %724 = vmatpush1.xpose.msra.mxu0 0.0
        %725 = vmatprep.subr.mxu0 0.0
        %726 = vmatpush1.xpose.msra.mxu0 0.0
        %727 = vmatprep.subr.mxu0 0.0
        %728 = vmatpush1.xpose.msra.mxu0 0.0
        %729 = vmatprep.subr.mxu0 0.0
        %730 = vmatpush1.xpose.msra.mxu0 0.0
        %731 = vmatprep.subr.mxu0 0.0
        %732 = vmatpush1.xpose.msra.mxu0 0.0
        %733 = vmatprep.subr.mxu0 0.0
        %734 = vmatpush1.xpose.msra.mxu0 0.0
        %735 = vmatprep.subr.mxu0 0.0
        %736 = vmatpush1.xpose.msra.mxu0 0.0
        %737 = vmatprep.subr.mxu0 0.0
        %738 = vmatpush1.xpose.msra.mxu0 0.0
        %739 = vmatprep.subr.mxu0 0.0
        %740 = vmatpush1.xpose.msra.mxu0 0.0
        %741 = vmatprep.subr.mxu0 0.0
        %742 = vmatpush1.xpose.msra.mxu0 0.0
        %743 = vmatprep.subr.mxu0 0.0
        %744 = vmatpush1.xpose.msra.mxu0 0.0
        %745 = vmatprep.subr.mxu0 0.0
        %746 = vmatpush1.xpose.msra.mxu0 0.0
        %747 = vmatprep.subr.mxu0 0.0
        %748 = vmatpush1.xpose.msra.mxu0 0.0
        %749 = vmatprep.subr.mxu0 0.0
        %750 = vmatpush1.xpose.msra.mxu0 0.0
        %751 = vmatprep.subr.mxu0 0.0
        %752 = vmatpush1.xpose.msra.mxu0 0.0
        %753 = vmatprep.subr.mxu0 0.0
        %754 = vmatpush1.xpose.msra.mxu0 0.0
        %755 = vmatprep.subr.mxu0 0.0
        %756 = vmatpush1.xpose.msra.mxu0 0.0
        %757 = vmatprep.subr.mxu0 0.0
        %758 = vmatpush1.xpose.msra.mxu0 0.0
        %759 = vmatprep.subr.mxu0 0.0
        %760 = vmatpush1.xpose.msra.mxu0 0.0
        %761 = vmatprep.subr.mxu0 0.0
        %762 = vmatpush1.xpose.msra.mxu0 0.0
        %763 = vmatprep.subr.mxu0 0.0
        %764 = vmatpush1.xpose.msra.mxu0 0.0
        %765 = vmatprep.subr.mxu0 0.0
        %766 = vmatpush1.xpose.msra.mxu0 0.0
        %767 = vmatprep.subr.mxu0 0.0
        %768 = vmatpush1.xpose.msra.mxu0 0.0
        %769 = vmatprep.subr.mxu0 0.0
        %770 = vmatpush1.xpose.msra.mxu0 0.0
        %771 = vmatprep.subr.mxu0 0.0
        %772 = vmatpush1.xpose.msra.mxu0 0.0
        %773 = vmatprep.subr.mxu0 0.0
        %774 = vmatpush1.xpose.msra.mxu0 0.0
        %775 = vmatprep.subr.mxu0 0.0
        %776 = vmatpush1.xpose.msra.mxu0 0.0
        %777 = vmatprep.subr.mxu0 0.0
        %778 = vmatpush1.xpose.msra.mxu0 0.0
        %779 = vmatprep.subr.mxu0 0.0
        %780 = vmatpush1.xpose.msra.mxu0 0.0
        %781 = vmatprep.subr.mxu0 0.0
        %782 = vmatpush1.xpose.msra.mxu0 0.0
        %783 = vmatprep.mubr.f32.mxu0 0.0
        %784 = vmatmul.mubr.f32.gmra.mrb[0].mxu0 %v718
        %v785 = vpop.f32.mrb[0].mxu0
        %v786 = vadd.f32 0.0, %v785
        %v787 = vpop.f32.mrb[0].mxu0
        %788 = vdwg.mxu0
        %s789 = scalar_lea.vmem %s280, 24 [#allocation9]
        %790 = vst.msk [vmem:[%s789] sm:$0xff] %vm570, %v786
        %s791 = sand.u32 %s143, 1
        %s792 = scalar_lea.sflag [#allocation5], %s791
        %s793 = sand.u32 %s143, 1
        %s794 = smul.addr %s793, 32
        %s795 = scalar_lea.vmem [#allocation9], %s794
        // Predicated region
        $region49: #{tpu_custom_call.1} parent=31 // pred_check
          %p796 = pneg %p153
        $region50: #{tpu_custom_call.1} parent=31 // pred_check_branch
          %798 = sbr.rel (%p796) target = $region52
        $region51: #{tpu_custom_call.1} parent=31 // pred_region
          %s799 = smul.u32 4, %s28
          %s801 = ssub.s32 512, 512
          %802 = vsyncadd %s792, %s801
          %s803 = sadd.s32 %s30, %s29
          %s804 = sadd.s32 %s803, %s799
          %s805 = smul.addr %s27, 4
          %s806 = sadd.s32 %s804, %s805
          %s807 = smul.addr %s806, 128
          %s808 = scalar_lea.hbm %s3, %s807
          %s809 = sshll.u32 %s795, 4
          %s810 = int_to_ptr.vmem [resolvable:$true] %s809
          %815 = dma.vmem_to_hbm [thread:$0]  %s810, 512, %s808, %s792, 128, 128, 8
        $region52: #{tpu_custom_call.1} parent=31 // pred_fallthru
          _
      $region32: #{tpu_custom_call.1} parent=5 // pred_fallthru
        _
      %p816 = scmp.le.s32.totalorder 2, %s16
      // Predicated region
      $region53: #{tpu_custom_call.1} parent=5 // pred_check
        %p817 = pneg %p816
      $region54: #{tpu_custom_call.1} parent=5 // pred_check_branch
        %819 = sbr.rel (%p817) target = $region56
      $region55: #{tpu_custom_call.1} parent=5 // pred_region
        %s820 = ssub.s32 %s16, 2
        // Predicated region
        $region57: #{tpu_custom_call.1} parent=55 // pred_check
          %p821 = pneg %p159
        $region58: #{tpu_custom_call.1} parent=55 // pred_check_branch
          %823 = sbr.rel (%p821) target = $region60
        $region59: #{tpu_custom_call.1} parent=55 // pred_region
          %s824 = sand.u32 %s144, 1
          %s825 = scalar_lea.sflag [#allocation5], %s824
          %s826 = sand.u32 %s144, 1
          %s827 = smul.addr %s826, 32
          %s828 = scalar_lea.vmem [#allocation9], %s827
          %829 = dma.done %s825, 512
        $region60: #{tpu_custom_call.1} parent=55 // pred_fallthru
          _
      $region56: #{tpu_custom_call.1} parent=5 // pred_fallthru
        _
    $region6: #{tpu_custom_call.1} parent=1 // loop_footer
      %s20 = sadd.s32 1, %s16
    $region7: #{tpu_custom_call.1} parent=1 // loop_footer_branch
      %15 = sbr.rel target = $region3
    $region8: #{tpu_custom_call.1} parent=1 // loop_exit
      _
    %830 = vsyncpa [#allocation4], 1
    %s831 = scalar_lea.sflag [#allocation4], 1
    %832 = vsyncpa %s831, 1
    %833 = vsyncpa [#allocation7], 1
    %834 = vsyncpa [#allocation5], 1
    %s835 = scalar_lea.sflag [#allocation5], 1
    %836 = vsyncpa %s835, 1

</llo_original>
